<compile_context>
chip_gen: v5e
topology: v5e:2x2
jax: 0.10.0
libtpu: 0.0.40
codegen_flags: <defaults>
</compile_context>

<pallas_src>
import jax
import jax.numpy as jnp
from jax.experimental import pallas as pl
from jax.experimental.pallas import tpu as pltpu


def mdnn_kernel(x_ref, w1_ref, b1_ref, w2_ref, b2_ref, wh_ref, bh_ref, out_ref):
    # ---- base network: Linear -> Tanh -> Linear (weights are pre-transposed (K, N)) ----
    h1 = jnp.dot(x_ref[...], w1_ref[...],
                 preferred_element_type=jnp.float32) + b1_ref[...]      # (TB, H0) f32
    h1 = jnp.tanh(h1)                                                    # f32 elementwise
    h2 = jnp.dot(h1.astype(w2_ref.dtype), w2_ref[...],
                 preferred_element_type=jnp.float32) + b2_ref[...]      # (TB, H1) f32

    # ---- all action heads fused: one matmul, one lane-dense store ----
    out = jnp.dot(h2.astype(wh_ref.dtype), wh_ref[...],
                  preferred_element_type=jnp.float32) + bh_ref[...]     # (TB, NH*A) f32
    out_ref[...] = out.astype(out_ref.dtype)


def multi_discrete_forward(x, w1, b1, w2, b2, wh, bh,
                           *, block_b=None, mxu_dtype=jnp.bfloat16):
    """x: (B, D_in); w1: (H0, D_in); b1: (H0,) or (1, H0); w2: (H1, H0);
    b2: (H1,) or (1, H1); wh: (NH, A, H1); bh: (NH, A).  Returns (B, NH, A) f32."""
    B, d_in = x.shape
    num_heads, A, h1_dim = wh.shape
    h0 = w1.shape[0]
    nha = num_heads * A

    # ---- layout plumbing (host side / constant-folded under jit) ----
    x_in = x.astype(mxu_dtype)                                           # (B, D_in)
    w1_t = jnp.transpose(w1).astype(mxu_dtype)                           # (D_in, H0)
    w2_t = jnp.transpose(w2).astype(mxu_dtype)                           # (H0, H1)
    wh_flat = jnp.transpose(wh, (2, 0, 1)).reshape(h1_dim, nha).astype(mxu_dtype)
    b1_row = jnp.reshape(b1, (1, h0)).astype(jnp.float32)
    b2_row = jnp.reshape(b2, (1, h1_dim)).astype(jnp.float32)
    bh_row = jnp.reshape(bh, (1, nha)).astype(jnp.float32)

    if block_b is None:
        block_b = B                                     # single grid step at small batch
    assert B % block_b == 0, "batch must be divisible by the batch tile"
    grid = (B // block_b,)

    def resident(shape):
        # whole-array block, same block index every grid step (stays resident in VMEM)
        return pl.BlockSpec(shape, lambda i: (0, 0))

    out_flat = pl.pallas_call(
        mdnn_kernel,
        out_shape=jax.ShapeDtypeStruct((B, nha), jnp.float32),
        grid=grid,
        in_specs=[
            pl.BlockSpec((block_b, d_in), lambda i: (i, 0)),   # x: tiled over batch
            resident((d_in, h0)),                              # w1.T
            resident((1, h0)),                                 # b1
            resident((h0, h1_dim)),                            # w2.T
            resident((1, h1_dim)),                             # b2
            resident((h1_dim, nha)),                           # fused head weights
            resident((1, nha)),                                # fused head biases
        ],
        out_specs=pl.BlockSpec((block_b, nha), lambda i: (i, 0)),
        compiler_params=pltpu.CompilerParams(
            dimension_semantics=("parallel",)),                # v7x: shard batch over 2 TCs
    )(x_in, w1_t, b1_row, w2_t, b2_row, wh_flat, bh_row)

    return out_flat.reshape(B, num_heads, A)


def _linear_init(key, out_features, in_features):
    """Deterministic PyTorch-style U(-1/sqrt(fan_in), 1/sqrt(fan_in)) init."""
    kw, kb = jax.random.split(key)
    bound = 1.0 / (in_features ** 0.5)
    w = jax.random.uniform(kw, (out_features, in_features),
                           minval=-bound, maxval=bound, dtype=jnp.float32)
    b = jax.random.uniform(kb, (out_features,),
                           minval=-bound, maxval=bound, dtype=jnp.float32)
    return w, b


if __name__ == "__main__":
    # Shapes implied by the module:
    #   input_layer_size=32, hidden_layers_size=[32, 32],
    #   output_layer_size=[5, 5, 5]  (uniform so torch.stack works)
    B, D_IN, H0, H1 = 8, 32, 32, 32
    NUM_HEADS, A = 3, 5

    key = jax.random.PRNGKey(0)
    k_x, k_l1, k_l2, k_heads = jax.random.split(key, 4)

    x = jax.random.normal(k_x, (B, D_IN), dtype=jnp.float32)

    w1, b1 = _linear_init(k_l1, H0, D_IN)          # base Linear 1 (PyTorch layout)
    w2, b2 = _linear_init(k_l2, H1, H0)            # base Linear 2

    head_keys = jax.random.split(k_heads, NUM_HEADS)
    wh_list, bh_list = [], []
    for hk in head_keys:
        w, b = _linear_init(hk, A, H1)
        wh_list.append(w)
        bh_list.append(b)
    wh = jnp.stack(wh_list, axis=0)                # (NUM_HEADS, A, H1)
    bh = jnp.stack(bh_list, axis=0)                # (NUM_HEADS, A)

    out = multi_discrete_forward(x, w1, b1, w2, b2, wh, bh)
    out = jax.block_until_ready(out)

    # Reference (plain JAX, full f32) check of the forward semantics.
    ref_h1 = jnp.tanh(x @ w1.T + b1[None, :])
    ref_h2 = ref_h1 @ w2.T + b2[None, :]
    ref = jnp.stack([ref_h2 @ wh[n].T + bh[n] for n in range(NUM_HEADS)], axis=-2)

    assert out.shape == (B, NUM_HEADS, A)
    # Tolerance loosened because MXU operands are bf16 (f32 accumulation).
    assert jnp.allclose(out, ref, atol=5e-2, rtol=5e-2), (
        float(jnp.max(jnp.abs(out - ref))))

    print("KERNEL_OK")
</pallas_src>

<mosaic_0001>
module attributes {stable_mosaic.version = 11 : i64} {
  func.func @mdnn_kernel(%arg0: i32, %arg1: memref<8x32xbf16, #tpu.memory_space<vmem>>, %arg2: memref<32x32xbf16, #tpu.memory_space<vmem>>, %arg3: memref<1x32xf32, #tpu.memory_space<vmem>>, %arg4: memref<32x32xbf16, #tpu.memory_space<vmem>>, %arg5: memref<1x32xf32, #tpu.memory_space<vmem>>, %arg6: memref<32x15xbf16, #tpu.memory_space<vmem>>, %arg7: memref<1x15xf32, #tpu.memory_space<vmem>>, %arg8: memref<8x15xf32, #tpu.memory_space<vmem>>) attributes {dimension_semantics = [#tpu.dimension_semantics<parallel>], iteration_bounds = array<i64: 1>, scalar_prefetch = 0 : i64, scratch_operands = 0 : i64, tpu.core_type = #tpu.core_type<tc>, window_params = [{transform_indices = @transform_0, window_bounds = array<i64: 8, 32>}, {pipeline_mode = #tpu.pipeline_mode<synchronous>, transform_indices = @transform_1, window_bounds = array<i64: 32, 32>}, {pipeline_mode = #tpu.pipeline_mode<synchronous>, transform_indices = @transform_2, window_bounds = array<i64: 1, 32>}, {pipeline_mode = #tpu.pipeline_mode<synchronous>, transform_indices = @transform_3, window_bounds = array<i64: 32, 32>}, {pipeline_mode = #tpu.pipeline_mode<synchronous>, transform_indices = @transform_4, window_bounds = array<i64: 1, 32>}, {pipeline_mode = #tpu.pipeline_mode<synchronous>, transform_indices = @transform_5, window_bounds = array<i64: 32, 15>}, {pipeline_mode = #tpu.pipeline_mode<synchronous>, transform_indices = @transform_6, window_bounds = array<i64: 1, 15>}, {transform_indices = @transform_7, window_bounds = array<i64: 8, 15>}]} {
    %c0 = arith.constant 0 : index
    %c0_0 = arith.constant 0 : index
    %0 = vector.load %arg1[%c0, %c0_0] : memref<8x32xbf16, #tpu.memory_space<vmem>>, vector<8x32xbf16>
    %c0_1 = arith.constant 0 : index
    %c0_2 = arith.constant 0 : index
    %1 = vector.load %arg2[%c0_1, %c0_2] : memref<32x32xbf16, #tpu.memory_space<vmem>>, vector<32x32xbf16>
    %cst = arith.constant dense<0.000000e+00> : vector<8x32xf32>
    %2 = tpu.matmul %0, %1, %cst {dimension_numbers = #tpu.dot_dimension_numbers<[1], [0], [0], [1], [0, 0, 1, 1], [], []>} : vector<8x32xbf16>, vector<32x32xbf16>, vector<8x32xf32> -> vector<8x32xf32>
    %c0_3 = arith.constant 0 : index
    %c0_4 = arith.constant 0 : index
    %3 = vector.load %arg3[%c0_3, %c0_4] : memref<1x32xf32, #tpu.memory_space<vmem>>, vector<1x32xf32>
    %4 = vector.broadcast %3 : vector<1x32xf32> to vector<8x32xf32>
    %5 = arith.addf %2, %4 : vector<8x32xf32>
    %6 = math.tanh %5 : vector<8x32xf32>
    %7 = arith.truncf %6 : vector<8x32xf32> to vector<8x32xbf16>
    %c0_5 = arith.constant 0 : index
    %c0_6 = arith.constant 0 : index
    %8 = vector.load %arg4[%c0_5, %c0_6] : memref<32x32xbf16, #tpu.memory_space<vmem>>, vector<32x32xbf16>
    %cst_7 = arith.constant dense<0.000000e+00> : vector<8x32xf32>
    %9 = tpu.matmul %7, %8, %cst_7 {dimension_numbers = #tpu.dot_dimension_numbers<[1], [0], [0], [1], [0, 0, 1, 1], [], []>} : vector<8x32xbf16>, vector<32x32xbf16>, vector<8x32xf32> -> vector<8x32xf32>
    %c0_8 = arith.constant 0 : index
    %c0_9 = arith.constant 0 : index
    %10 = vector.load %arg5[%c0_8, %c0_9] : memref<1x32xf32, #tpu.memory_space<vmem>>, vector<1x32xf32>
    %11 = vector.broadcast %10 : vector<1x32xf32> to vector<8x32xf32>
    %12 = arith.addf %9, %11 : vector<8x32xf32>
    %13 = arith.truncf %12 : vector<8x32xf32> to vector<8x32xbf16>
    %c0_10 = arith.constant 0 : index
    %c0_11 = arith.constant 0 : index
    %14 = vector.load %arg6[%c0_10, %c0_11] : memref<32x15xbf16, #tpu.memory_space<vmem>>, vector<32x15xbf16>
    %cst_12 = arith.constant dense<0.000000e+00> : vector<8x15xf32>
    %15 = tpu.matmul %13, %14, %cst_12 {dimension_numbers = #tpu.dot_dimension_numbers<[1], [0], [0], [1], [0, 0, 1, 1], [], []>} : vector<8x32xbf16>, vector<32x15xbf16>, vector<8x15xf32> -> vector<8x15xf32>
    %c0_13 = arith.constant 0 : index
    %c0_14 = arith.constant 0 : index
    %16 = vector.load %arg7[%c0_13, %c0_14] : memref<1x15xf32, #tpu.memory_space<vmem>>, vector<1x15xf32>
    %17 = vector.broadcast %16 : vector<1x15xf32> to vector<8x15xf32>
    %18 = arith.addf %15, %17 : vector<8x15xf32>
    %c0_15 = arith.constant 0 : index
    %c0_16 = arith.constant 0 : index
    %19 = vector.load %arg8[%c0_15, %c0_16] : memref<8x15xf32, #tpu.memory_space<vmem>>, vector<8x15xf32>
    tpu.vector_store %arg8[%c0_15, %c0_16], %18 {strides = array<i32>} : memref<8x15xf32, #tpu.memory_space<vmem>>, vector<8x15xf32>,
    return
  }
  func.func @transform_0(%arg0: i32) -> (i32, i32) {
    %c0_i32 = arith.constant 0 : i32
    %c0_i32_0 = arith.constant 0 : i32
    return %arg0, %c0_i32 : i32, i32
  }
  func.func @transform_1(%arg0: i32) -> (i32, i32) {
    %c0_i32 = arith.constant 0 : i32
    %c0_i32_0 = arith.constant 0 : i32
    %c0_i32_1 = arith.constant 0 : i32
    return %c0_i32, %c0_i32_0 : i32, i32
  }
  func.func @transform_2(%arg0: i32) -> (i32, i32) {
    %c0_i32 = arith.constant 0 : i32
    %c0_i32_0 = arith.constant 0 : i32
    %c0_i32_1 = arith.constant 0 : i32
    return %c0_i32, %c0_i32_0 : i32, i32
  }
  func.func @transform_3(%arg0: i32) -> (i32, i32) {
    %c0_i32 = arith.constant 0 : i32
    %c0_i32_0 = arith.constant 0 : i32
    %c0_i32_1 = arith.constant 0 : i32
    return %c0_i32, %c0_i32_0 : i32, i32
  }
  func.func @transform_4(%arg0: i32) -> (i32, i32) {
    %c0_i32 = arith.constant 0 : i32
    %c0_i32_0 = arith.constant 0 : i32
    %c0_i32_1 = arith.constant 0 : i32
    return %c0_i32, %c0_i32_0 : i32, i32
  }
  func.func @transform_5(%arg0: i32) -> (i32, i32) {
    %c0_i32 = arith.constant 0 : i32
    %c0_i32_0 = arith.constant 0 : i32
    %c0_i32_1 = arith.constant 0 : i32
    return %c0_i32, %c0_i32_0 : i32, i32
  }
  func.func @transform_6(%arg0: i32) -> (i32, i32) {
    %c0_i32 = arith.constant 0 : i32
    %c0_i32_0 = arith.constant 0 : i32
    %c0_i32_1 = arith.constant 0 : i32
    return %c0_i32, %c0_i32_0 : i32, i32
  }
  func.func @transform_7(%arg0: i32) -> (i32, i32) {
    %c0_i32 = arith.constant 0 : i32
    %c0_i32_0 = arith.constant 0 : i32
    return %arg0, %c0_i32 : i32, i32
  }
}

</mosaic_0001>

<llo_original>
// kernel: tpu_custom_call.1
$region0: #{tpu_custom_call.1}
  #allocation0 [shape = 'u32[]', space=smem, size = 0x4, offset = 0x4, fixed_abs, tag = 'smem constant byte address 0x4 - core index']
  #allocation1 [shape = 'u32[72,128]{1,0:T(1,128)}', space=vmem, size = 0x9000, scoped, tag = 'internal scratch']
  %s0 = inlined_call_operand.vmem [shape: bf16[8,32], index: 0, kind: input, shape index: {}]
  %s1 = inlined_call_operand.vmem [shape: bf16[32,32], index: 1, kind: input, shape index: {}]
  %s2 = inlined_call_operand.vmem [shape: f32[1,32], index: 2, kind: input, shape index: {}]
  %s3 = inlined_call_operand.hbm [shape: bf16[32,32], index: 3, kind: input, shape index: {}]
  %s4 = inlined_call_operand.vmem [shape: f32[1,32], index: 4, kind: input, shape index: {}]
  %s5 = inlined_call_operand.vmem [shape: bf16[32,15], index: 5, kind: input, shape index: {}]
  %s6 = inlined_call_operand.vmem [shape: f32[1,15], index: 6, kind: input, shape index: {}]
  %s7 = inlined_call_operand.hbm [shape: f32[8,15], index: 7, kind: output, shape index: {}]
  %s8 = sld [smem:[#allocation0]]
  $region42: #{tpu_custom_call.1} parent=0
    _
  %s10 = ssub.s32 1, %s8
  %s11 = scalar_select 0, %s10, %s8
  $region1: #{tpu_custom_call.1} parent=0
    #allocation2 [shape = 'u8[8192]{0}', space=vmem, size = 0x2000, scoped, tag = 'input window, operand 3, single buffered']
    #allocation3 [shape = 's32[1]{0}', space=sflag, size = 0x4, scoped, tag = 'scoped memory for tpu_custom_call.1']
    #allocation4 [shape = 's32[1]{0}', space=sflag, size = 0x4, scoped, tag = 'scoped memory for tpu_custom_call.1']
    #allocation5 [shape = 'u8[4096]{0}', space=vmem, size = 0x1000, scoped, tag = 'output window, operand 0, single buffered']
    %12 = vsyncpa [#allocation3], 0
    %13 = vsyncpa [#allocation4], 0
    // Predicated region
    $region2: #{tpu_custom_call.1} parent=1 // pred_check
      _
    $region3: #{tpu_custom_call.1} parent=1 // pred_check_branch
      %15 = sbr.rel (0) target = $region5
    $region4: #{tpu_custom_call.1} parent=1 // pred_region
      _
    $region5: #{tpu_custom_call.1} parent=1 // pred_fallthru
      _
    // Predicated region
    $region6: #{tpu_custom_call.1} parent=1 // pred_check
      _
    $region7: #{tpu_custom_call.1} parent=1 // pred_check_branch
      %17 = sbr.rel (0) target = $region9
    $region8: #{tpu_custom_call.1} parent=1 // pred_region
      _
    $region9: #{tpu_custom_call.1} parent=1 // pred_fallthru
      _
    // Predicated region
    $region10: #{tpu_custom_call.1} parent=1 // pred_check
      _
    $region11: #{tpu_custom_call.1} parent=1 // pred_check_branch
      %19 = sbr.rel (0) target = $region13
    $region12: #{tpu_custom_call.1} parent=1 // pred_region
      _
    $region13: #{tpu_custom_call.1} parent=1 // pred_fallthru
      _
    // Predicated region
    $region14: #{tpu_custom_call.1} parent=1 // pred_check
      _
    $region15: #{tpu_custom_call.1} parent=1 // pred_check_branch
      %21 = sbr.rel (0) target = $region17
    $region16: #{tpu_custom_call.1} parent=1 // pred_region
      %23 = vsyncadd [#allocation3], 0
      %s24 = sshll.u32 %s3, 4
      %s25 = int_to_ptr.hbm [resolvable:$true] %s24
      %s26 = sshll.u32 [#allocation2], 4
      %s27 = int_to_ptr.vmem [resolvable:$true] %s26
      %32 = dma.hbm_to_vmem [thread:$0]  %s25, 256, %s27, [#allocation3], 64, 64, 4
    $region17: #{tpu_custom_call.1} parent=1 // pred_fallthru
      _
    // Predicated region
    $region18: #{tpu_custom_call.1} parent=1 // pred_check
      _
    $region19: #{tpu_custom_call.1} parent=1 // pred_check_branch
      %34 = sbr.rel (0) target = $region21
    $region20: #{tpu_custom_call.1} parent=1 // pred_region
      _
    $region21: #{tpu_custom_call.1} parent=1 // pred_fallthru
      _
    // Predicated region
    $region22: #{tpu_custom_call.1} parent=1 // pred_check
      _
    $region23: #{tpu_custom_call.1} parent=1 // pred_check_branch
      %36 = sbr.rel (0) target = $region25
    $region24: #{tpu_custom_call.1} parent=1 // pred_region
      _
    $region25: #{tpu_custom_call.1} parent=1 // pred_fallthru
      _
    // Predicated region
    $region26: #{tpu_custom_call.1} parent=1 // pred_check
      _
    $region27: #{tpu_custom_call.1} parent=1 // pred_check_branch
      %38 = sbr.rel (0) target = $region29
    $region28: #{tpu_custom_call.1} parent=1 // pred_region
      _
    $region29: #{tpu_custom_call.1} parent=1 // pred_fallthru
      _
    // Predicated region
    $region30: #{tpu_custom_call.1} parent=1 // pred_check
      _
    $region31: #{tpu_custom_call.1} parent=1 // pred_check_branch
      %40 = sbr.rel (0) target = $region33
    $region32: #{tpu_custom_call.1} parent=1 // pred_region
      %42 = dma.done [#allocation3], 256
    $region33: #{tpu_custom_call.1} parent=1 // pred_fallthru
      _
    %v44 = vld [vmem:[%s0] sm:$0xf]
    %v45 = vld [vmem:[%s1] sm:$0xf]
    %v46 = vld [vmem:[%s1 + $0x4] sm:$0xf]
    %v47 = vld [vmem:[%s1 + $0x8] sm:$0xf]
    %v48 = vld [vmem:[%s1 + $0xc] sm:$0xf]
    %v49 = vld [vmem:[%s2] sm:$0x1]
    %v51 = vperm.slane %v49, 0
    %v57 = vunpack.c.l.b16 %v45
    %v58 = vunpack.c.l.b16 %v46
    %v59 = vunpack.c.l.b16 %v47
    %v60 = vunpack.c.l.b16 %v48
    %v61 = vpack.c.b16 %v58, %v57
    %v62 = vpack.c.b16 %v60, %v59
    %vm65 = vcmask 261120
    %v67 = vsel %vm65, %v44, 0
    %69 = vmatpush.bf16.msra.mxu0 0
    %70 = vmatpush.bf16.msra.mxu0 0
    %71 = vmatpush.bf16.msra.mxu0 0
    %72 = vmatpush.bf16.msra.mxu0 0
    %73 = vmatpush.bf16.msra.mxu0 0
    %74 = vmatpush.bf16.msra.mxu0 0
    %75 = vmatpush.bf16.msra.mxu0 %v62
    %76 = vmatpush.bf16.msra.mxu0 %v61
    %77 = vmatmul.bf16.gmra.mxu0 %v67
    %v78 = vpop.f32.mrf.mxu0
    %v79 = vadd.f32 %v51, %v78
    %v80 = vpop.f32.mrf.mxu0
    %81 = vdwg.mxu0
    %v82 = vtanh.pop %v79
    %v83 = vpack.c.bf16 %v82, %v82
    %v84 = vld [vmem:[#allocation2] sm:$0xf]
    %v85 = vld [vmem:[#allocation2 + $0x4] sm:$0xf]
    %v86 = vld [vmem:[#allocation2 + $0x8] sm:$0xf]
    %v87 = vld [vmem:[#allocation2 + $0xc] sm:$0xf]
    %v88 = vld [vmem:[%s4] sm:$0x1]
    %v90 = vperm.slane %v88, 0
    %v96 = vunpack.c.l.b16 %v84
    %v97 = vunpack.c.l.b16 %v85
    %v98 = vunpack.c.l.b16 %v86
    %v99 = vunpack.c.l.b16 %v87
    %v100 = vpack.c.b16 %v97, %v96
    %v101 = vpack.c.b16 %v99, %v98
    %v105 = vsel %vm65, %v83, 0
    %107 = vmatpush.bf16.msra.mxu0 0
    %108 = vmatpush.bf16.msra.mxu0 0
    %109 = vmatpush.bf16.msra.mxu0 0
    %110 = vmatpush.bf16.msra.mxu0 0
    %111 = vmatpush.bf16.msra.mxu0 0
    %112 = vmatpush.bf16.msra.mxu0 0
    %113 = vmatpush.bf16.msra.mxu0 %v101
    %114 = vmatpush.bf16.msra.mxu0 %v100
    %115 = vmatmul.bf16.gmra.mxu0 %v105
    %v116 = vpop.f32.mrf.mxu0
    %v117 = vadd.f32 %v90, %v116
    %v118 = vpop.f32.mrf.mxu0
    %119 = vdwg.mxu0
    %v120 = vpack.c.bf16 %v117, %v117
    %v121 = vld [vmem:[%s5] sm:$0xf]
    %v122 = vld [vmem:[%s5 + $0x4] sm:$0xf]
    %v123 = vld [vmem:[%s5 + $0x8] sm:$0xf]
    %v124 = vld [vmem:[%s5 + $0xc] sm:$0xf]
    %v125 = vld [vmem:[%s6] sm:$0x1]
    %v127 = vperm.slane %v125, 0
    %v133 = vunpack.c.l.b16 %v121
    %v134 = vunpack.c.l.b16 %v122
    %v135 = vunpack.c.l.b16 %v123
    %v136 = vunpack.c.l.b16 %v124
    %v137 = vpack.c.b16 %v134, %v133
    %v138 = vpack.c.b16 %v136, %v135
    %v142 = vsel %vm65, %v120, 0
    %144 = vmatpush.bf16.msra.mxu0 0
    %145 = vmatpush.bf16.msra.mxu0 0
    %146 = vmatpush.bf16.msra.mxu0 0
    %147 = vmatpush.bf16.msra.mxu0 0
    %148 = vmatpush.bf16.msra.mxu0 0
    %149 = vmatpush.bf16.msra.mxu0 0
    %150 = vmatpush.bf16.msra.mxu0 %v138
    %151 = vmatpush.bf16.msra.mxu0 %v137
    %152 = vmatmul.bf16.gmra.mxu0 %v142
    %v153 = vpop.f32.mrf.mxu0
    %v154 = vadd.f32 %v127, %v153
    %v155 = vpop.f32.mrf.mxu0
    %156 = vdwg.mxu0
    %vm157 = vcmask 121856
    %158 = vst.msk [vmem:[#allocation5] sm:$0xff] %vm157, %v154
    // Predicated region
    $region34: #{tpu_custom_call.1} parent=1 // pred_check
      _
    $region35: #{tpu_custom_call.1} parent=1 // pred_check_branch
      %160 = sbr.rel (0) target = $region37
    $region36: #{tpu_custom_call.1} parent=1 // pred_region
      %162 = vsyncadd [#allocation4], 0
      %s164 = sshll.u32 [#allocation5], 4
      %s165 = int_to_ptr.vmem [resolvable:$true] %s164
      %s166 = sshll.u32 %s7, 4
      %s167 = int_to_ptr.hbm [resolvable:$true] %s166
      %169 = dma.vmem_to_hbm [thread:$0]  %s165, 128, %s167, [#allocation4]
    $region37: #{tpu_custom_call.1} parent=1 // pred_fallthru
      _
    // Predicated region
    $region38: #{tpu_custom_call.1} parent=1 // pred_check
      _
    $region39: #{tpu_custom_call.1} parent=1 // pred_check_branch
      %171 = sbr.rel (0) target = $region41
    $region40: #{tpu_custom_call.1} parent=1 // pred_region
      %173 = dma.done [#allocation4], 128
    $region41: #{tpu_custom_call.1} parent=1 // pred_fallthru
      _
    %174 = vsyncpa [#allocation3], 1
    %175 = vsyncpa [#allocation4], 1

</llo_original>
